<compile_context>
chip_gen: v6e
topology: v6e:2x2x1
jax: 0.10.0
libtpu: 0.0.40
codegen_flags: <defaults>
</compile_context>

<pallas_src>
import jax
import jax.numpy as jnp
from jax import lax
from jax.experimental import pallas as pl
from jax.experimental.pallas import tpu as pltpu


LANES = 128            # lane width (fixed by the vreg layout)
MAX_TILE_ROWS = 1024   # 1024 x 128 f32 = 512 KiB per input buffer


def _round_up(x: int, m: int) -> int:
    return ((x + m - 1) // m) * m


def loss_dsc_fake(rhat: jax.Array) -> jax.Array:
    """Pallas equivalent of LossDSCfake.forward: mean(relu(rhat))."""
    orig_count = rhat.size
    if orig_count == 0:
        return jnp.float32(jnp.nan)   # torch .mean() of an empty tensor is nan

    flat = rhat.reshape(-1)

    # Common case: free reshape to (rows, 128).  Otherwise (count not a
    # multiple of 128, or tiny input) pad up to a multiple of 8*128;
    # relu(0) == 0 so padding contributes nothing to the sum.
    if orig_count % LANES != 0 or orig_count < 8 * LANES:
        padded = _round_up(orig_count, 8 * LANES)
        flat = jnp.pad(flat, (0, padded - orig_count))
    rows = flat.shape[0] // LANES
    x2d = flat.reshape(rows, LANES)

    # Tile geometry: tile_rows is a multiple of 8 and <= rows, so the block
    # shape always satisfies the (8, 128) constraint and never exceeds the
    # array extent.
    tile_rows = min(MAX_TILE_ROWS, (rows // 8) * 8)
    total_tiles = pl.cdiv(rows, tile_rows)

    # Split tiles into two chunks along a leading "parallel" axis so v7x's
    # two TensorCores can each take half (no-op on 1-TC chips).
    num_chunks = 2 if total_tiles >= 2 else 1
    tiles_per_chunk = pl.cdiv(total_tiles, num_chunks)

    has_partial_tile = (rows % tile_rows) != 0
    has_extra_tiles = (num_chunks * tiles_per_chunk) != total_tiles
    needs_mask = has_partial_tile or has_extra_tiles

    def kernel(x_ref, out_ref):
        i = pl.program_id(1)

        @pl.when(i == 0)
        def _():
            out_ref[...] = jnp.zeros_like(out_ref)

        r = jnp.maximum(x_ref[...], 0).astype(jnp.float32)

        if needs_mask:
            # Zero rows past the valid extent: garbage rows of the final
            # partial block and (clamped) duplicate tiles of chunk 1.
            t = pl.program_id(0) * tiles_per_chunk + i
            row_ids = t * tile_rows + lax.broadcasted_iota(
                jnp.int32, (tile_rows, LANES), 0)
            r = jnp.where(row_ids < rows, r, 0.0)

        # Fold sublane groups into the resident (8, 128) accumulator block:
        # pure VPU adds each step, no per-step cross-lane reduction.
        out_ref[...] += r.reshape(tile_rows // 8, 8, LANES).sum(axis=0)

    def x_index_map(c, i):
        t = c * tiles_per_chunk + i
        if has_extra_tiles:
            # Chunk 1 may run one redundant step when total_tiles is odd;
            # clamp the block index and let the row mask zero its data.
            t = jnp.minimum(t, total_tiles - 1)
        return (t, 0)

    partials = pl.pallas_call(
        kernel,
        out_shape=jax.ShapeDtypeStruct((num_chunks * 8, LANES), jnp.float32),
        grid_spec=pltpu.PrefetchScalarGridSpec(
            num_scalar_prefetch=0,
            grid=(num_chunks, tiles_per_chunk),
            in_specs=[pl.BlockSpec((tile_rows, LANES), x_index_map)],
            out_specs=pl.BlockSpec((8, LANES), lambda c, i: (c, 0)),
        ),
        compiler_params=pltpu.CompilerParams(
            dimension_semantics=("parallel", "arbitrary")),
    )(x2d)

    # Single final cross-lane reduction + mean over the ORIGINAL element
    # count (matches torch .mean()).
    total = jnp.sum(partials)
    return (total / jnp.float32(orig_count)).astype(jnp.float32)


if __name__ == "__main__":
    key = jax.random.PRNGKey(0)

    test_shapes = [
        (2, 4, 16, 16),    # single full-array tile, no mask, no pad
        (3, 7, 16, 16),    # 2 chunks + partial last tile -> mask/clamp path
        (2, 3, 20, 24),    # count % 128 != 0 -> small-pad fallback path
        (4, 16, 64, 64),   # multi-tile, even 2-chunk split, no mask
    ]

    for idx, shape in enumerate(test_shapes):
        k = jax.random.fold_in(key, idx)
        rhat = jax.random.normal(k, shape, dtype=jnp.float32)
        loss = jax.block_until_ready(loss_dsc_fake(rhat))
        ref = jnp.mean(jnp.maximum(rhat, 0.0))
        assert jnp.allclose(loss, ref, rtol=1e-5, atol=1e-6), (shape, loss, ref)

    print("KERNEL_OK")
</pallas_src>

<mosaic_0001>
module attributes {stable_mosaic.version = 11 : i64} {
  func.func @kernel(%arg0: i32, %arg1: i32, %arg2: memref<16x128xf32, #tpu.memory_space<vmem>>, %arg3: memref<8x128xf32, #tpu.memory_space<vmem>>) attributes {dimension_semantics = [#tpu.dimension_semantics<parallel>, #tpu.dimension_semantics<arbitrary>], iteration_bounds = array<i64: 1, 1>, scalar_prefetch = 0 : i64, scratch_operands = 0 : i64, tpu.core_type = #tpu.core_type<tc>, window_params = [{transform_indices = @transform_0, window_bounds = array<i64: 16, 128>}, {transform_indices = @transform_1, window_bounds = array<i64: 8, 128>}]} {
    %c0_i32 = arith.constant 0 : i32
    %0 = arith.cmpi eq, %arg1, %c0_i32 : i32
    %1 = arith.extui %0 : i1 to i32
    %c0_i32_0 = arith.constant 0 : i32
    %2 = arith.cmpi ne, %1, %c0_i32_0 : i32
    scf.if %2 {
      %cst_7 = arith.constant 0.000000e+00 : f32
      %11 = vector.broadcast %cst_7 : f32 to vector<8x128xf32>
      %c0_8 = arith.constant 0 : index
      %c0_9 = arith.constant 0 : index
      %12 = vector.load %arg3[%c0_8, %c0_9] : memref<8x128xf32, #tpu.memory_space<vmem>>, vector<8x128xf32>
      tpu.vector_store %arg3[%c0_8, %c0_9], %11 {strides = array<i32>} : memref<8x128xf32, #tpu.memory_space<vmem>>, vector<8x128xf32>,
    } else {
    }
    %c0 = arith.constant 0 : index
    %c0_1 = arith.constant 0 : index
    %3 = vector.load %arg2[%c0, %c0_1] : memref<16x128xf32, #tpu.memory_space<vmem>>, vector<16x128xf32>
    %cst = arith.constant 0.000000e+00 : f32
    %4 = vector.broadcast %cst : f32 to vector<16x128xf32>
    %5 = arith.maximumf %3, %4 : vector<16x128xf32>
    %c0_2 = arith.constant 0 : index
    %c0_3 = arith.constant 0 : index
    %6 = vector.load %arg3[%c0_2, %c0_3] : memref<8x128xf32, #tpu.memory_space<vmem>>, vector<8x128xf32>
    %7 = vector.shape_cast %5 : vector<16x128xf32> to vector<2x8x128xf32>
    %cst_4 = arith.constant dense<0.000000e+00> : vector<8x128xf32>
    %8 = vector.multi_reduction <add>, %7, %cst_4 [0] : vector<2x8x128xf32> to vector<8x128xf32>
    %9 = arith.addf %6, %8 : vector<8x128xf32>
    %c0_5 = arith.constant 0 : index
    %c0_6 = arith.constant 0 : index
    %10 = vector.load %arg3[%c0_5, %c0_6] : memref<8x128xf32, #tpu.memory_space<vmem>>, vector<8x128xf32>
    tpu.vector_store %arg3[%c0_5, %c0_6], %9 {strides = array<i32>} : memref<8x128xf32, #tpu.memory_space<vmem>>, vector<8x128xf32>,
    return
  }
  func.func @transform_0(%arg0: i32, %arg1: i32) -> (i32, i32) {
    %c1_i32 = arith.constant 1 : i32
    %0 = arith.muli %arg0, %c1_i32 : i32
    %1 = arith.addi %0, %arg1 : i32
    %c0_i32 = arith.constant 0 : i32
    %c0_i32_0 = arith.constant 0 : i32
    return %1, %c0_i32 : i32, i32
  }
  func.func @transform_1(%arg0: i32, %arg1: i32) -> (i32, i32) {
    %c0_i32 = arith.constant 0 : i32
    %c0_i32_0 = arith.constant 0 : i32
    return %arg0, %c0_i32 : i32, i32
  }
}

</mosaic_0001>

<llo_original>
// kernel: tpu_custom_call.1
$region0: #{tpu_custom_call.1}
  #allocation0 [shape = 'u32[]', space=smem, size = 0x4, offset = 0x4, fixed_abs, tag = 'smem constant byte address 0x4 - core index']
  #allocation1 [shape = 'u32[144,128]{1,0:T(1,128)}', space=vmem, size = 0x12000, scoped, tag = 'internal scratch']
  %s0 = inlined_call_operand.hbm [shape: f32[16,128], index: 0, kind: input, shape index: {}]
  %s1 = inlined_call_operand.hbm [shape: f32[8,128], index: 1, kind: output, shape index: {}]
  %s2 = sld [smem:[#allocation0]]
  $region22: #{tpu_custom_call.1} parent=0
    _
  %s4 = ssub.s32 1, %s2
  %s5 = scalar_select 0, %s4, %s2
  $region1: #{tpu_custom_call.1} parent=0
    #allocation2 [shape = 'u8[8192]{0}', space=vmem, size = 0x2000, scoped, tag = 'input window, operand 0, single buffered']
    #allocation3 [shape = 's32[1]{0}', space=sflag, size = 0x4, scoped, tag = 'scoped memory for tpu_custom_call.1']
    #allocation4 [shape = 's32[1]{0}', space=sflag, size = 0x4, scoped, tag = 'scoped memory for tpu_custom_call.1']
    #allocation5 [shape = 'u8[4096]{0}', space=vmem, size = 0x1000, scoped, tag = 'output window, operand 0, single buffered']
    %6 = vsyncpa [#allocation3], 0
    %7 = vsyncpa [#allocation4], 0
    // Predicated region
    $region2: #{tpu_custom_call.1} parent=1 // pred_check
      _
    $region3: #{tpu_custom_call.1} parent=1 // pred_check_branch
      %9 = sbr.rel (0) target = $region5
    $region4: #{tpu_custom_call.1} parent=1 // pred_region
      %s10 = sadd.s32 0, 0
      %s11 = smul.u32 2, %s10
      %s13 = ssub.s32 256, 256
      %14 = vsyncadd [#allocation3], %s13
      %s15 = smul.addr %s11, 128
      %s16 = scalar_lea.hbm %s0, %s15
      %s17 = sshll.u32 [#allocation2], 4
      %s18 = int_to_ptr.vmem [resolvable:$true] %s17
      %23 = dma.hbm_to_vmem [thread:$0]  %s16, 256, %s18, [#allocation3], 128, 128, 8
    $region5: #{tpu_custom_call.1} parent=1 // pred_fallthru
      _
    // Predicated region
    $region6: #{tpu_custom_call.1} parent=1 // pred_check
      _
    $region7: #{tpu_custom_call.1} parent=1 // pred_check_branch
      %25 = sbr.rel (0) target = $region9
    $region8: #{tpu_custom_call.1} parent=1 // pred_region
      %26 = dma.done [#allocation3], 256
    $region9: #{tpu_custom_call.1} parent=1 // pred_fallthru
      _
    %s27 = sadd.s32 0, 0
    %s28 = smul.u32 2, %s27
    %p29 = scmp.eq.s32.totalorder 0, 0
    // Predicated region
    $region10: #{tpu_custom_call.1} parent=1 // pred_check
      %p30 = pneg %p29
    $region11: #{tpu_custom_call.1} parent=1 // pred_check_branch
      %32 = sbr.rel (%p30) target = $region13
    $region12: #{tpu_custom_call.1} parent=1 // pred_region
      %33 = vst [vmem:[#allocation5] sm:$0xff] 0.0
    $region13: #{tpu_custom_call.1} parent=1 // pred_fallthru
      _
    %v34 = vld [vmem:[#allocation2] sm:$0xff]
    %v35 = vld [vmem:[#allocation2 + $0x8] sm:$0xff]
    %v36 = vmax.f32 %v34, 0.0
    %v37 = vmax.f32 %v35, 0.0
    %v38 = vld [vmem:[#allocation5] sm:$0xff]
    %v39 = vadd.f32 %v36, %v37
    %v40 = vadd.f32 %v38, %v39
    %41 = vst [vmem:[#allocation5] sm:$0xff] %v40
    // Predicated region
    $region14: #{tpu_custom_call.1} parent=1 // pred_check
      _
    $region15: #{tpu_custom_call.1} parent=1 // pred_check_branch
      %43 = sbr.rel (0) target = $region17
    $region16: #{tpu_custom_call.1} parent=1 // pred_region
      %s45 = ssub.s32 128, 128
      %46 = vsyncadd [#allocation4], %s45
      %s48 = sshll.u32 [#allocation5], 4
      %s49 = int_to_ptr.vmem [resolvable:$true] %s48
      %51 = dma.vmem_to_hbm [thread:$0]  %s49, 128, %s1, [#allocation4]
    $region17: #{tpu_custom_call.1} parent=1 // pred_fallthru
      _
    // Predicated region
    $region18: #{tpu_custom_call.1} parent=1 // pred_check
      _
    $region19: #{tpu_custom_call.1} parent=1 // pred_check_branch
      %53 = sbr.rel (0) target = $region21
    $region20: #{tpu_custom_call.1} parent=1 // pred_region
      %54 = dma.done [#allocation4], 128
    $region21: #{tpu_custom_call.1} parent=1 // pred_fallthru
      _
    %55 = vsyncpa [#allocation3], 1
    %56 = vsyncpa [#allocation4], 1

</llo_original>
